<compile_context>
chip_gen: v7x
topology: tpu7x:2x2x1
jax: 0.10.0
libtpu: 0.0.40
codegen_flags: <defaults>
</compile_context>

<pallas_src>
import math
from functools import partial

import jax
import jax.numpy as jnp
from jax.experimental import pallas as pl
from jax.experimental.pallas import tpu as pltpu

B, LQ, LK, D, DV = 2, 3, 3, 5, 7
DROPOUT_P = 0.5
PACK = 2 * D + DV + LK  # [ q | k | v | dropout-mask ] along the last axis


def sdpa_dropout_kernel(packed_ref, o_ref, *, bias):
    # Single VMEM tile holds everything; static lane slices are free.
    packed = packed_ref[...]                          # (B, LQ, PACK) f32
    q = packed[:, :, 0:D]                             # (B, LQ, D)
    k = packed[:, :, D:2 * D]                         # (B, LK, D)
    v = packed[:, :, 2 * D:2 * D + DV]                # (B, LK, DV)
    mask = packed[:, :, 2 * D + DV:PACK]              # (B, LQ, LK), values in {0, 1/(1-p)}

    # Logits: q @ k^T / sqrt(D) + bias — VPU broadcast-mul + lane reduce
    # (skipping the MXU entirely at this tiny size).
    s = jnp.sum(q[:, :, None, :] * k[:, None, :, :], axis=-1)   # (B, LQ, LK)
    s = s * (1.0 / math.sqrt(D)) + bias

    # Softmax over the last axis.
    m = jnp.max(s, axis=-1, keepdims=True)
    e = jnp.exp(s - m)
    w = e * (1.0 / jnp.sum(e, axis=-1, keepdims=True))

    # Dropout (training=True): mask already carries the 1/(1-p) scaling.
    w = w * mask

    # attn_weight @ value, again as broadcast-mul + reduce over the K axis.
    o_ref[...] = jnp.sum(w[:, :, :, None] * v[:, None, :, :], axis=2)  # (B, LQ, DV)


def model_forward(x1, query, key, value, *, rng_key):
    """x1: python scalar bias added to the (B, LQ, LK) logits (baked at compile time)."""
    # Dropout keep-mask, pre-scaled by 1/(1-p).  Statistically equivalent to
    # torch.dropout but not bit-identical to torch's RNG stream.
    keep = jax.random.bernoulli(rng_key, 1.0 - DROPOUT_P, (B, LQ, LK))
    mask = keep.astype(jnp.float32) * (1.0 / (1.0 - DROPOUT_P))

    # One packed input → one DMA into VMEM.
    packed = jnp.concatenate(
        [query.astype(jnp.float32),
         key.astype(jnp.float32),
         value.astype(jnp.float32),
         mask],
        axis=-1,
    )  # (B, LQ, PACK)

    return pl.pallas_call(
        partial(sdpa_dropout_kernel, bias=float(x1)),
        out_shape=jax.ShapeDtypeStruct((B, LQ, DV), jnp.float32),
        in_specs=[pl.BlockSpec(memory_space=pltpu.MemorySpace.VMEM)],
        out_specs=pl.BlockSpec(memory_space=pltpu.MemorySpace.VMEM),
    )(packed)


if __name__ == "__main__":
    root = jax.random.PRNGKey(0)
    kq, kk, kv, kdrop = jax.random.split(root, 4)

    # Deterministic "parameters" (torch.randn equivalents).
    query = jax.random.normal(kq, (B, LQ, D), dtype=jnp.float32)
    key = jax.random.normal(kk, (B, LK, D), dtype=jnp.float32)
    value = jax.random.normal(kv, (B, LK, DV), dtype=jnp.float32)

    x1 = 1.0  # matches the module-scope `x1 = 1`

    out = model_forward(x1, query, key, value, rng_key=kdrop)
    out = jax.block_until_ready(out)

    assert out.shape == (B, LQ, DV), out.shape
    assert out.dtype == jnp.float32
    assert bool(jnp.all(jnp.isfinite(out)))
    print("KERNEL_OK")
</pallas_src>

<mosaic_0001>
module attributes {stable_mosaic.version = 11 : i64} {
  func.func @sdpa_dropout_kernel(%arg0: memref<2x3x20xf32, #tpu.memory_space<vmem>>, %arg1: memref<2x3x7xf32, #tpu.memory_space<vmem>>) attributes {dimension_semantics = [], scalar_prefetch = 0 : i64, scratch_operands = 0 : i64, tpu.core_type = #tpu.core_type<tc>} {
    %c0 = arith.constant 0 : index
    %c0_0 = arith.constant 0 : index
    %c0_1 = arith.constant 0 : index
    %0 = vector.load %arg0[%c0, %c0_0, %c0_1] : memref<2x3x20xf32, #tpu.memory_space<vmem>>, vector<2x3x20xf32>
    %1 = vector.extract_strided_slice %0 {offsets = [0, 0, 0], sizes = [2, 3, 5], strides = [1, 1, 1]} : vector<2x3x20xf32> to vector<2x3x5xf32>
    %2 = vector.extract_strided_slice %0 {offsets = [0, 0, 5], sizes = [2, 3, 5], strides = [1, 1, 1]} : vector<2x3x20xf32> to vector<2x3x5xf32>
    %3 = vector.extract_strided_slice %0 {offsets = [0, 0, 10], sizes = [2, 3, 7], strides = [1, 1, 1]} : vector<2x3x20xf32> to vector<2x3x7xf32>
    %4 = vector.extract_strided_slice %0 {offsets = [0, 0, 17], sizes = [2, 3, 3], strides = [1, 1, 1]} : vector<2x3x20xf32> to vector<2x3x3xf32>
    %5 = vector.shape_cast %1 : vector<2x3x5xf32> to vector<2x3x1x5xf32>
    %6 = vector.shape_cast %2 : vector<2x3x5xf32> to vector<2x1x3x5xf32>
    %7 = vector.broadcast %5 : vector<2x3x1x5xf32> to vector<2x3x3x5xf32>
    %8 = vector.broadcast %6 : vector<2x1x3x5xf32> to vector<2x3x3x5xf32>
    %9 = arith.mulf %7, %8 : vector<2x3x3x5xf32>
    %cst = arith.constant dense<0.000000e+00> : vector<2x3x3xf32>
    %10 = vector.multi_reduction <add>, %9, %cst [3] : vector<2x3x3x5xf32> to vector<2x3x3xf32>
    %cst_2 = arith.constant 0.44721359 : f32
    %11 = vector.broadcast %cst_2 : f32 to vector<2x3x3xf32>
    %12 = arith.mulf %10, %11 : vector<2x3x3xf32>
    %cst_3 = arith.constant 1.000000e+00 : f32
    %13 = vector.broadcast %cst_3 : f32 to vector<2x3x3xf32>
    %14 = arith.addf %12, %13 : vector<2x3x3xf32>
    %cst_4 = arith.constant dense<0xFF800000> : vector<2x3xf32>
    %15 = vector.multi_reduction <maximumf>, %14, %cst_4 [2] : vector<2x3x3xf32> to vector<2x3xf32>
    %16 = vector.shape_cast %15 : vector<2x3xf32> to vector<2x3x1xf32>
    %17 = vector.broadcast %16 : vector<2x3x1xf32> to vector<2x3x3xf32>
    %18 = arith.subf %14, %17 : vector<2x3x3xf32>
    %19 = math.exp %18 : vector<2x3x3xf32>
    %cst_5 = arith.constant dense<0.000000e+00> : vector<2x3xf32>
    %20 = vector.multi_reduction <add>, %19, %cst_5 [2] : vector<2x3x3xf32> to vector<2x3xf32>
    %21 = vector.shape_cast %20 : vector<2x3xf32> to vector<2x3x1xf32>
    %cst_6 = arith.constant 1.000000e+00 : f32
    %22 = vector.broadcast %cst_6 : f32 to vector<2x3x1xf32>
    %23 = arith.divf %22, %21 : vector<2x3x1xf32>
    %24 = vector.broadcast %23 : vector<2x3x1xf32> to vector<2x3x3xf32>
    %25 = arith.mulf %19, %24 : vector<2x3x3xf32>
    %26 = arith.mulf %25, %4 : vector<2x3x3xf32>
    %27 = vector.shape_cast %26 : vector<2x3x3xf32> to vector<2x3x3x1xf32>
    %28 = vector.shape_cast %3 : vector<2x3x7xf32> to vector<2x1x3x7xf32>
    %29 = vector.broadcast %27 : vector<2x3x3x1xf32> to vector<2x3x3x7xf32>
    %30 = vector.broadcast %28 : vector<2x1x3x7xf32> to vector<2x3x3x7xf32>
    %31 = arith.mulf %29, %30 : vector<2x3x3x7xf32>
    %cst_7 = arith.constant dense<0.000000e+00> : vector<2x3x7xf32>
    %32 = vector.multi_reduction <add>, %31, %cst_7 [2] : vector<2x3x3x7xf32> to vector<2x3x7xf32>
    %c0_8 = arith.constant 0 : index
    %c0_9 = arith.constant 0 : index
    %c0_10 = arith.constant 0 : index
    %33 = vector.load %arg1[%c0_8, %c0_9, %c0_10] : memref<2x3x7xf32, #tpu.memory_space<vmem>>, vector<2x3x7xf32>
    tpu.vector_store %arg1[%c0_8, %c0_9, %c0_10], %32 {strides = array<i32>} : memref<2x3x7xf32, #tpu.memory_space<vmem>>, vector<2x3x7xf32>,
    return
  }
}

</mosaic_0001>

<llo_original>
// kernel: tpu_custom_call.1
$region0: #{tpu_custom_call.1}
  #allocation0 [shape = 'u32[]', space=smem, size = 0x4, offset = 0x4, fixed_abs, tag = 'smem constant byte address 0x4 - core index']
  #allocation1 [shape = 'u32[144,128]{1,0:T(1,128)}', space=vmem, size = 0x12000, scoped, tag = 'internal scratch']
  %s0 = inlined_call_operand.vmem [shape: f32[2,3,20], index: 0, kind: input, shape index: {}]
  %s1 = inlined_call_operand.vmem [shape: f32[2,3,7], index: 1, kind: output, shape index: {}]
  %s2 = sld [smem:[#allocation0]]
  $region14: #{tpu_custom_call.1} parent=0
    _
  %s4 = ssub.s32 1, %s2
  %s5 = scalar_select 0, %s4, %s2
  // Predicated region
  $region2: #{tpu_custom_call.1} parent=0 // pred_check
    _
  $region3: #{tpu_custom_call.1} parent=0 // pred_check_branch
    %7 = sbr.rel (0) target = $region5
  $region4: #{tpu_custom_call.1} parent=0 // pred_region
    _
  $region5: #{tpu_custom_call.1} parent=0 // pred_fallthru
    _
  %v8 = vld [vmem:[%s0] sm:$0x7]
  %v9 = vld [vmem:[%s0 + $0x4] sm:$0x7]
  %v13 = vunpack.c.l.s4 1966171168
  %v14 = vunpack.c.0.s8 %v13
  %v15 = vlaneseq
  %v16 = vshrl.u32 %v15, 7
  %v17 = vsub.s32 %v14, %v16
  %v18 = vrot.slane %v8, %v17
  %v19 = vcombine.high %v18, %v18
  %v21 = vunpack.c.l.s4 1966171168
  %v22 = vunpack.c.0.s8 %v21
  %v23 = vlaneseq
  %v24 = vshrl.u32 %v23, 7
  %v25 = vsub.s32 %v22, %v24
  %v26 = vrot.slane %v18, %v25
  %v28 = vunpack.c.l.s4 1966171168
  %v29 = vunpack.c.0.s8 %v28
  %v30 = vlaneseq
  %v31 = vshrl.u32 %v30, 7
  %v32 = vsub.s32 %v29, %v31
  %v33 = vrot.slane %v19, %v32
  %v34 = vcombine.high %v26, %v26
  %v36 = vunpack.c.l.s4 1966171168
  %v37 = vunpack.c.0.s8 %v36
  %v38 = vlaneseq
  %v39 = vshrl.u32 %v38, 7
  %v40 = vsub.s32 %v37, %v39
  %v41 = vrot.slane %v9, %v40
  %v42 = vcombine.high %v41, %v41
  %v44 = vunpack.c.l.s4 1966171168
  %v45 = vunpack.c.0.s8 %v44
  %v46 = vlaneseq
  %v47 = vshrl.u32 %v46, 7
  %v48 = vsub.s32 %v45, %v47
  %v49 = vrot.slane %v41, %v48
  %v51 = vunpack.c.l.s4 1966171168
  %v52 = vunpack.c.0.s8 %v51
  %v53 = vlaneseq
  %v54 = vshrl.u32 %v53, 7
  %v55 = vsub.s32 %v52, %v54
  %v56 = vrot.slane %v42, %v55
  %v57 = vcombine.high %v49, %v49
  %v58 = vlaneseq
  %v59 = vshrl.u32 %v58, 7
  %v60 = vsub.s32 0, %v59
  %v61 = vrot.slane %v26, %v60
  %v62 = vlaneseq
  %v63 = vshrl.u32 %v62, 7
  %v64 = vsub.s32 0, %v63
  %v65 = vrot.slane %v33, %v64
  %v66 = vlaneseq
  %v67 = vshrl.u32 %v66, 7
  %v68 = vsub.s32 0, %v67
  %v69 = vrot.slane %v34, %v68
  %v70 = vlaneseq
  %v71 = vshrl.u32 %v70, 7
  %v72 = vsub.s32 0, %v71
  %v73 = vrot.slane %v49, %v72
  %v74 = vlaneseq
  %v75 = vshrl.u32 %v74, 7
  %v76 = vsub.s32 0, %v75
  %v77 = vrot.slane %v56, %v76
  %v78 = vlaneseq
  %v79 = vshrl.u32 %v78, 7
  %v80 = vsub.s32 0, %v79
  %v81 = vrot.slane %v57, %v80
  %88 = vrot.lane.b32.xlu0 %v8, 123
  %v89 = vpop.permute.xlu0 %88
  %90 = vrot.lane.b32.xlu0 %v9, 123
  %v91 = vpop.permute.xlu0 %90
  %v94 = vmul.f32 %v61, %v89
  %v95 = vmul.f32 %v65, %v89
  %v96 = vmul.f32 %v69, %v89
  %v97 = vmul.f32 %v73, %v91
  %v98 = vmul.f32 %v77, %v91
  %v99 = vmul.f32 %v81, %v91
  %vm100 = vcmask 34816
  %v101 = vsel %vm100, %v94, 0.0
  %102 = vadd.xlane.f32.xlu0 %v101
  %v103 = vpop.xlane.xlu0 %102
  %v104 = vsel %vm100, %v95, 0.0
  %105 = vadd.xlane.f32.xlu0 %v104
  %v106 = vpop.xlane.xlu0 %105
  %v107 = vsel %vm100, %v96, 0.0
  %108 = vadd.xlane.f32.xlu0 %v107
  %v109 = vpop.xlane.xlu0 %108
  %v110 = vsel %vm100, %v97, 0.0
  %111 = vadd.xlane.f32.xlu0 %v110
  %v112 = vpop.xlane.xlu0 %111
  %v113 = vsel %vm100, %v98, 0.0
  %114 = vadd.xlane.f32.xlu0 %v113
  %v115 = vpop.xlane.xlu0 %114
  %v116 = vsel %vm100, %v99, 0.0
  %117 = vadd.xlane.f32.xlu0 %v116
  %v118 = vpop.xlane.xlu0 %117
  %v119 = vmul.f32 %v103, 0.4472136
  %v120 = vmul.f32 %v106, 0.4472136
  %v121 = vmul.f32 %v109, 0.4472136
  %v122 = vmul.f32 %v112, 0.4472136
  %v123 = vmul.f32 %v115, 0.4472136
  %v124 = vmul.f32 %v118, 0.4472136
  %v125 = vadd.f32 %v119, 1.0
  %v126 = vadd.f32 %v120, 1.0
  %v127 = vadd.f32 %v121, 1.0
  %v128 = vadd.f32 %v122, 1.0
  %v129 = vadd.f32 %v123, 1.0
  %v130 = vadd.f32 %v124, 1.0
  %v137 = vlaneseq
  %v138 = vand.u32 %v137, 127
  %v139 = vlaneseq
  %v140 = vshrl.u32 %v139, 7
  %v141 = vsub.s32 %v138, %v140
  %v142 = vrot.slane %v125, %v141
  %v143 = vlaneseq
  %v144 = vshrl.u32 %v143, 7
  %v145 = vsub.s32 %v138, %v144
  %v146 = vrot.slane %v126, %v145
  %v147 = vlaneseq
  %v148 = vshrl.u32 %v147, 7
  %v149 = vsub.s32 %v138, %v148
  %v150 = vrot.slane %v127, %v149
  %v151 = vlaneseq
  %v152 = vshrl.u32 %v151, 7
  %v153 = vsub.s32 %v138, %v152
  %v154 = vrot.slane %v128, %v153
  %v155 = vlaneseq
  %v156 = vshrl.u32 %v155, 7
  %v157 = vsub.s32 %v138, %v156
  %v158 = vrot.slane %v129, %v157
  %v159 = vlaneseq
  %v160 = vshrl.u32 %v159, 7
  %v161 = vsub.s32 %v138, %v160
  %v162 = vrot.slane %v130, %v161
  %vm163 = vcmask 1041409
  %v164 = vsel %vm163, %v146, %v142
  %vm165 = vcmask 1042434
  %v166 = vsel %vm165, %v150, %v164
  %v167 = vsel %vm163, %v158, %v154
  %v168 = vsel %vm165, %v162, %v167
  %vm171 = vcmask 18432
  %v172 = vsel %vm171, %v166, -inf
  %173 = vmax.xlane.f32.xlu0 %v172
  %v174 = vpop.xlane.xlu0 %173
  %v175 = vsel %vm171, %v168, -inf
  %176 = vmax.xlane.f32.xlu0 %v175
  %v177 = vpop.xlane.xlu0 %176
  %v180 = vlaneseq
  %v181 = vshrl.u32 %v180, 7
  %v182 = vsub.s32 0, %v181
  %v183 = vrot.slane %v174, %v182
  %v184 = vlaneseq
  %v185 = vshrl.u32 %v184, 7
  %v186 = vsub.s32 1, %v185
  %v187 = vrot.slane %v174, %v186
  %v188 = vlaneseq
  %v189 = vshrl.u32 %v188, 7
  %v190 = vsub.s32 2, %v189
  %v191 = vrot.slane %v174, %v190
  %v192 = vlaneseq
  %v193 = vshrl.u32 %v192, 7
  %v194 = vsub.s32 0, %v193
  %v195 = vrot.slane %v177, %v194
  %v196 = vlaneseq
  %v197 = vshrl.u32 %v196, 7
  %v198 = vsub.s32 1, %v197
  %v199 = vrot.slane %v177, %v198
  %v200 = vlaneseq
  %v201 = vshrl.u32 %v200, 7
  %v202 = vsub.s32 2, %v201
  %v203 = vrot.slane %v177, %v202
  %v210 = vsub.f32 %v125, %v183
  %v211 = vsub.f32 %v126, %v187
  %v212 = vsub.f32 %v127, %v191
  %v213 = vsub.f32 %v128, %v195
  %v214 = vsub.f32 %v129, %v199
  %v215 = vsub.f32 %v130, %v203
  %v216 = vmul.f32 %v210, 1.442695
  %v217 = vpow.pop %v216
  %v218 = vmul.f32 %v211, 1.442695
  %v219 = vpow.pop %v218
  %v220 = vmul.f32 %v212, 1.442695
  %v221 = vpow.pop %v220
  %v222 = vmul.f32 %v213, 1.442695
  %v223 = vpow.pop %v222
  %v224 = vmul.f32 %v214, 1.442695
  %v225 = vpow.pop %v224
  %v226 = vmul.f32 %v215, 1.442695
  %v227 = vpow.pop %v226
  %234 = vset.pattern.permute.xlu0 0
  %235 = vperm.xlu0 %234, %v217
  %v236 = vpop.permute.xlu0 %235
  %237 = vset.pattern.permute.xlu0 0
  %238 = vperm.xlu0 %237, %v219
  %v239 = vpop.permute.xlu0 %238
  %240 = vset.pattern.permute.xlu0 0
  %241 = vperm.xlu0 %240, %v221
  %v242 = vpop.permute.xlu0 %241
  %243 = vset.pattern.permute.xlu0 0
  %244 = vperm.xlu0 %243, %v223
  %v245 = vpop.permute.xlu0 %244
  %246 = vset.pattern.permute.xlu0 0
  %247 = vperm.xlu0 %246, %v225
  %v248 = vpop.permute.xlu0 %247
  %249 = vset.pattern.permute.xlu0 0
  %250 = vperm.xlu0 %249, %v227
  %v251 = vpop.permute.xlu0 %250
  %v252 = vlaneseq
  %v253 = vshrl.u32 %v252, 7
  %v254 = vsub.s32 %v138, %v253
  %v255 = vrot.slane %v236, %v254
  %v256 = vlaneseq
  %v257 = vshrl.u32 %v256, 7
  %v258 = vsub.s32 %v138, %v257
  %v259 = vrot.slane %v239, %v258
  %v260 = vlaneseq
  %v261 = vshrl.u32 %v260, 7
  %v262 = vsub.s32 %v138, %v261
  %v263 = vrot.slane %v242, %v262
  %v264 = vlaneseq
  %v265 = vshrl.u32 %v264, 7
  %v266 = vsub.s32 %v138, %v265
  %v267 = vrot.slane %v245, %v266
  %v268 = vlaneseq
  %v269 = vshrl.u32 %v268, 7
  %v270 = vsub.s32 %v138, %v269
  %v271 = vrot.slane %v248, %v270
  %v272 = vlaneseq
  %v273 = vshrl.u32 %v272, 7
  %v274 = vsub.s32 %v138, %v273
  %v275 = vrot.slane %v251, %v274
  %v276 = vsel %vm163, %v259, %v255
  %v277 = vsel %vm165, %v263, %v276
  %v278 = vsel %vm163, %v271, %v267
  %v279 = vsel %vm165, %v275, %v278
  %v282 = vsel %vm171, %v277, 0.0
  %283 = vadd.xlane.f32.xlu0 %v282
  %v284 = vpop.xlane.xlu0 %283
  %v285 = vsel %vm171, %v279, 0.0
  %286 = vadd.xlane.f32.xlu0 %v285
  %v287 = vpop.xlane.xlu0 %286
  %v288 = vrcp.pop %v284
  %v289 = vmul.f32 1.0, %v288
  %v290 = vrcp.pop %v287
  %v291 = vmul.f32 1.0, %v290
  %v294 = vlaneseq
  %v295 = vshrl.u32 %v294, 7
  %v296 = vsub.s32 0, %v295
  %v297 = vrot.slane %v289, %v296
  %v298 = vlaneseq
  %v299 = vshrl.u32 %v298, 7
  %v300 = vsub.s32 1, %v299
  %v301 = vrot.slane %v289, %v300
  %v302 = vlaneseq
  %v303 = vshrl.u32 %v302, 7
  %v304 = vsub.s32 2, %v303
  %v305 = vrot.slane %v289, %v304
  %v306 = vlaneseq
  %v307 = vshrl.u32 %v306, 7
  %v308 = vsub.s32 0, %v307
  %v309 = vrot.slane %v291, %v308
  %v310 = vlaneseq
  %v311 = vshrl.u32 %v310, 7
  %v312 = vsub.s32 1, %v311
  %v313 = vrot.slane %v291, %v312
  %v314 = vlaneseq
  %v315 = vshrl.u32 %v314, 7
  %v316 = vsub.s32 2, %v315
  %v317 = vrot.slane %v291, %v316
  %v324 = vmul.f32 %v217, %v297
  %v325 = vmul.f32 %v219, %v301
  %v326 = vmul.f32 %v221, %v305
  %v327 = vmul.f32 %v223, %v309
  %v328 = vmul.f32 %v225, %v313
  %v329 = vmul.f32 %v227, %v317
  %v330 = vlaneseq
  %v331 = vshrl.u32 %v330, 7
  %v332 = vsub.s32 0, %v331
  %v333 = vrot.slane %v8, %v332
  %s335 = sor.u32 256, 17
  %336 = vbcast.lane.b32.xlu0 %v333, %s335
  %v337 = vpop.permute.xlu0 %336
  %v338 = vlaneseq
  %v339 = vshrl.u32 %v338, 7
  %v340 = vsub.s32 1, %v339
  %v341 = vrot.slane %v8, %v340
  %s343 = sor.u32 256, 17
  %344 = vbcast.lane.b32.xlu0 %v341, %s343
  %v345 = vpop.permute.xlu0 %344
  %v346 = vlaneseq
  %v347 = vshrl.u32 %v346, 7
  %v348 = vsub.s32 2, %v347
  %v349 = vrot.slane %v8, %v348
  %s351 = sor.u32 256, 17
  %352 = vbcast.lane.b32.xlu0 %v349, %s351
  %v353 = vpop.permute.xlu0 %352
  %v354 = vlaneseq
  %v355 = vshrl.u32 %v354, 7
  %v356 = vsub.s32 0, %v355
  %v357 = vrot.slane %v9, %v356
  %s359 = sor.u32 256, 17
  %360 = vbcast.lane.b32.xlu0 %v357, %s359
  %v361 = vpop.permute.xlu0 %360
  %v362 = vlaneseq
  %v363 = vshrl.u32 %v362, 7
  %v364 = vsub.s32 1, %v363
  %v365 = vrot.slane %v9, %v364
  %s367 = sor.u32 256, 17
  %368 = vbcast.lane.b32.xlu0 %v365, %s367
  %v369 = vpop.permute.xlu0 %368
  %v370 = vlaneseq
  %v371 = vshrl.u32 %v370, 7
  %v372 = vsub.s32 2, %v371
  %v373 = vrot.slane %v9, %v372
  %s375 = sor.u32 256, 17
  %376 = vbcast.lane.b32.xlu0 %v373, %s375
  %v377 = vpop.permute.xlu0 %376
  %v384 = vmul.f32 %v324, %v337
  %v385 = vmul.f32 %v325, %v345
  %v386 = vmul.f32 %v326, %v353
  %v387 = vmul.f32 %v327, %v361
  %v388 = vmul.f32 %v328, %v369
  %v389 = vmul.f32 %v329, %v377
  %391 = vset.pattern.permute.xlu0 0
  %392 = vperm.xlu0 %391, %v384
  %v393 = vpop.permute.xlu0 %392
  %396 = vset.pattern.permute.xlu0 0
  %397 = vperm.xlu0 %396, %v385
  %v398 = vpop.permute.xlu0 %397
  %401 = vset.pattern.permute.xlu0 0
  %402 = vperm.xlu0 %401, %v386
  %v403 = vpop.permute.xlu0 %402
  %406 = vset.pattern.permute.xlu0 0
  %407 = vperm.xlu0 %406, %v387
  %v408 = vpop.permute.xlu0 %407
  %411 = vset.pattern.permute.xlu0 0
  %412 = vperm.xlu0 %411, %v388
  %v413 = vpop.permute.xlu0 %412
  %416 = vset.pattern.permute.xlu0 0
  %417 = vperm.xlu0 %416, %v389
  %v418 = vpop.permute.xlu0 %417
  %v420 = vmul.f32 %v393, %v8
  %v421 = vmul.f32 %v398, %v8
  %v422 = vmul.f32 %v403, %v8
  %v423 = vmul.f32 %v408, %v9
  %v424 = vmul.f32 %v413, %v9
  %v425 = vmul.f32 %v418, %v9
  %vm426 = vcmask 133200
  %v427 = vsel %vm426, %v420, 0.0
  %v428 = vrot.slane %v427, 4
  %v429 = vadd.f32 %v427, %v428
  %v430 = vrot.slane %v429, 2
  %v431 = vadd.f32 %v429, %v430
  %v432 = vrot.slane %v431, 1
  %v433 = vadd.f32 %v431, %v432
  %v434 = vsel %vm426, %v421, 0.0
  %v435 = vrot.slane %v434, 4
  %v436 = vadd.f32 %v434, %v435
  %v437 = vrot.slane %v436, 2
  %v438 = vadd.f32 %v436, %v437
  %v439 = vrot.slane %v438, 1
  %v440 = vadd.f32 %v438, %v439
  %v441 = vsel %vm426, %v422, 0.0
  %v442 = vrot.slane %v441, 4
  %v443 = vadd.f32 %v441, %v442
  %v444 = vrot.slane %v443, 2
  %v445 = vadd.f32 %v443, %v444
  %v446 = vrot.slane %v445, 1
  %v447 = vadd.f32 %v445, %v446
  %v448 = vsel %vm426, %v423, 0.0
  %v449 = vrot.slane %v448, 4
  %v450 = vadd.f32 %v448, %v449
  %v451 = vrot.slane %v450, 2
  %v452 = vadd.f32 %v450, %v451
  %v453 = vrot.slane %v452, 1
  %v454 = vadd.f32 %v452, %v453
  %v455 = vsel %vm426, %v424, 0.0
  %v456 = vrot.slane %v455, 4
  %v457 = vadd.f32 %v455, %v456
  %v458 = vrot.slane %v457, 2
  %v459 = vadd.f32 %v457, %v458
  %v460 = vrot.slane %v459, 1
  %v461 = vadd.f32 %v459, %v460
  %v462 = vsel %vm426, %v425, 0.0
  %v463 = vrot.slane %v462, 4
  %v464 = vadd.f32 %v462, %v463
  %v465 = vrot.slane %v464, 2
  %v466 = vadd.f32 %v464, %v465
  %v467 = vrot.slane %v466, 1
  %v468 = vadd.f32 %v466, %v467
  %v475 = vsel %vm163, %v440, %v433
  %v476 = vsel %vm165, %v447, %v475
  %v477 = vsel %vm163, %v461, %v454
  %v478 = vsel %vm165, %v468, %v477
  %479 = vrot.lane.b32.xlu0 %v476, 118
  %v480 = vpop.permute.xlu0 %479
  %481 = vrot.lane.b32.xlu0 %v478, 118
  %v482 = vpop.permute.xlu0 %481
  %vm485 = vcmask 51200
  %486 = vst.msk [vmem:[%s1] sm:$0x7] %vm485, %v480
  %487 = vst.msk [vmem:[%s1 + $0x4] sm:$0x7] %vm485, %v482
  // Predicated region
  $region6: #{tpu_custom_call.1} parent=0 // pred_check
    _
  $region7: #{tpu_custom_call.1} parent=0 // pred_check_branch
    %489 = sbr.rel (0) target = $region9
  $region8: #{tpu_custom_call.1} parent=0 // pred_region
    _
  $region9: #{tpu_custom_call.1} parent=0 // pred_fallthru
    _
  // Predicated region
  $region10: #{tpu_custom_call.1} parent=0 // pred_check
    _
  $region11: #{tpu_custom_call.1} parent=0 // pred_check_branch
    %491 = sbr.rel (0) target = $region13
  $region12: #{tpu_custom_call.1} parent=0 // pred_region
    _
  $region13: #{tpu_custom_call.1} parent=0 // pred_fallthru
    _

</llo_original>
